<compile_context>
chip_gen: v7x
topology: tpu7x:2x2x1
jax: 0.10.0
libtpu: 0.0.40
codegen_flags: <defaults>
</compile_context>

<pallas_src>
import jax
import jax.numpy as jnp
from jax.experimental import pallas as pl
from jax.experimental.pallas import tpu as pltpu


def _round_up(x: int, m: int) -> int:
    return ((x + m - 1) // m) * m


def _dividing_tile(extent_128: int, cap: int) -> int:
    """Largest multiple of 128 <= cap that evenly divides extent_128.
    extent_128 is itself a multiple of 128, so 128 always works."""
    t = min(cap, extent_128)
    t = (t // 128) * 128
    while t > 128 and extent_128 % t != 0:
        t -= 128
    return max(t, 128)


# ----------------------------- kernels --------------------------------------

def _linear_kernel_1k(x_ref, w_ref, b_ref, o_ref):
    # Whole (padded) K in one block: no accumulator, no K grid axis, bias fused.
    o_ref[...] = (
        jnp.dot(x_ref[...], w_ref[...], preferred_element_type=jnp.float32)
        + b_ref[...]
    ).astype(o_ref.dtype)


def _linear_kernel_multik(x_ref, w_ref, b_ref, o_ref):
    # K split across the innermost grid axis; accumulate directly into the
    # resident f32 output tile (no VMEM scratch, no zero-init pass).
    k = pl.program_id(2)
    part = jnp.dot(x_ref[...], w_ref[...], preferred_element_type=jnp.float32)

    @pl.when(k == 0)
    def _():
        o_ref[...] = part + b_ref[...]

    @pl.when(k > 0)
    def _():
        o_ref[...] += part


# ----------------------------- wrapper ---------------------------------------

def init_det_grammar_predictor_params(weight, bias):
    """One-time (init-time) prep of the static nn.Linear parameters.

    - transposes the PyTorch-layout (N, K) weight to (K, N),
    - pads N and K up to multiples of 128 once (lane alignment),
    so the per-call forward never pads or copies the weight again.
    """
    N, K = weight.shape
    assert bias.shape == (N,)
    Np = _round_up(N, 128)
    Kp = _round_up(K, 128)
    w_t = jnp.pad(jnp.transpose(weight), ((0, Kp - K), (0, Np - N)))  # (Kp, Np)
    b = jnp.pad(bias, (0, Np - N)).reshape(1, Np)                     # (1, Np)
    return {"w_t_padded": w_t, "bias_padded": b, "N": N, "K": K}


def det_grammar_predictor_forward(x, params, *, force_pallas: bool = False):
    """y = x @ W.T + b  (DetGrammarPredictorLayer.forward).  x: (B, K) f32."""
    B, K = x.shape
    N = params["N"]
    assert K == params["K"]
    w_t = params["w_t_padded"]       # (Kp, Np) f32
    b = params["bias_padded"]        # (1, Np)  f32
    Kp, Np = w_t.shape

    # Tiny-problem fast path: pad + launch + slice overhead dominates; let XLA fuse.
    if not force_pallas and B * Kp * Np <= (1 << 16):
        y = jnp.dot(jnp.pad(x, ((0, 0), (0, Kp - K))), w_t) + b
        return y[:B, :N]

    # ---- tile selection ------------------------------------------------------
    # M: sublane-aligned; allow up to 512 so big batches re-stream the weight
    #    from HBM fewer times (M is the outermost grid axis).
    tm = min(512, _round_up(B, 8))
    Mp = _round_up(B, tm)
    # K: single block when it fits (drop K grid axis + accumulator); otherwise
    #    the largest 128-multiple tile dividing Kp (no dead weight reads).
    tk = Kp if Kp <= 2048 else _dividing_tile(Kp, 2048)
    # N: largest 128-multiple tile <= 1024 that divides Np (no dead weight reads).
    tn = _dividing_tile(Np, 1024)
    # v7x has 2 TensorCores/chip: ensure the 'parallel' grid has >= 2 tiles.
    if (Mp // tm) * (Np // tn) < 2 and Np >= 256:
        tn = _dividing_tile(Np, Np // 2)

    grid_m, grid_n, grid_k = Mp // tm, Np // tn, Kp // tk

    xp = x if (Mp == B and Kp == K) else jnp.pad(x, ((0, Mp - B), (0, Kp - K)))

    # Double-buffered working set (+ slack); cap well under v7x's 64 MiB VMEM/TC.
    tile_bytes = 4 * (tm * tk + tk * tn + tm * tn + tn)
    vmem_limit = int(min(48 * 1024 * 1024, max(16 * 1024 * 1024, 3 * tile_bytes)))

    cost = pl.CostEstimate(
        flops=2 * Mp * Np * Kp,
        transcendentals=0,
        bytes_accessed=4 * (Mp * Kp + Kp * Np + Mp * Np),
    )

    if grid_k == 1:
        grid = (grid_m, grid_n)
        kernel = _linear_kernel_1k
        in_specs = [
            pl.BlockSpec((tm, tk), lambda i, j: (i, 0)),   # x
            pl.BlockSpec((tk, tn), lambda i, j: (0, j)),   # W.T (K, N) layout
            pl.BlockSpec((1, tn), lambda i, j: (0, j)),    # bias
        ]
        out_specs = pl.BlockSpec((tm, tn), lambda i, j: (i, j))
        dims = ("parallel", "parallel")
    else:
        grid = (grid_m, grid_n, grid_k)
        kernel = _linear_kernel_multik
        in_specs = [
            pl.BlockSpec((tm, tk), lambda i, j, k: (i, k)),
            pl.BlockSpec((tk, tn), lambda i, j, k: (k, j)),
            pl.BlockSpec((1, tn), lambda i, j, k: (0, j)),
        ]
        out_specs = pl.BlockSpec((tm, tn), lambda i, j, k: (i, j))
        dims = ("parallel", "parallel", "arbitrary")

    out_padded = pl.pallas_call(
        kernel,
        out_shape=jax.ShapeDtypeStruct((Mp, Np), jnp.float32),
        grid_spec=pltpu.PrefetchScalarGridSpec(
            num_scalar_prefetch=0,
            grid=grid,
            in_specs=in_specs,
            out_specs=out_specs,
        ),
        compiler_params=pltpu.CompilerParams(
            dimension_semantics=dims,
            vmem_limit_bytes=vmem_limit,
        ),
        cost_estimate=cost,
    )(xp, w_t, b)

    return out_padded[:B, :N]


if __name__ == "__main__":
    # --- synthetic, deterministic "grammar" setup (only output_size matters) ---
    # e.g. 3 abstract non-terminals with 5, 7, 4 primitives each.
    all_pairs_sizes = [5, 7, 4]
    output_size = sum(all_pairs_sizes)   # = 16
    input_size = 32
    batch_size = 2

    key = jax.random.PRNGKey(0)
    kx, kw, kb = jax.random.split(key, 3)

    # nn.Linear-style init: U(-1/sqrt(in), 1/sqrt(in))
    bound = 1.0 / (input_size ** 0.5)
    weight = jax.random.uniform(kw, (output_size, input_size), jnp.float32,
                                minval=-bound, maxval=bound)
    bias = jax.random.uniform(kb, (output_size,), jnp.float32,
                              minval=-bound, maxval=bound)
    x = jax.random.normal(kx, (batch_size, input_size), jnp.float32)

    # One-time parameter prep (pad + transpose), then the per-call forward.
    params = init_det_grammar_predictor_params(weight, bias)
    y = det_grammar_predictor_forward(x, params, force_pallas=True)
    y = jax.block_until_ready(y)

    # Reference check (plain JAX). MXU f32 matmuls may use bf16-pass arithmetic,
    # so the tolerance is sized accordingly.
    y_ref = x @ weight.T + bias
    assert y.shape == (batch_size, output_size)
    assert jnp.allclose(y, y_ref, atol=1e-2, rtol=1e-2), \
        float(jnp.max(jnp.abs(y - y_ref)))

    print("KERNEL_OK")
</pallas_src>

<mosaic_0001>
module attributes {stable_mosaic.version = 11 : i64} {
  func.func @_linear_kernel_1k(%arg0: i32, %arg1: i32, %arg2: memref<8x128xf32, #tpu.memory_space<vmem>>, %arg3: memref<128x128xf32, #tpu.memory_space<vmem>>, %arg4: memref<1x128xf32, #tpu.memory_space<vmem>>, %arg5: memref<8x128xf32, #tpu.memory_space<vmem>>) attributes {dimension_semantics = [#tpu.dimension_semantics<parallel>, #tpu.dimension_semantics<parallel>], iteration_bounds = array<i64: 1, 1>, scalar_prefetch = 0 : i64, scratch_operands = 0 : i64, tpu.core_type = #tpu.core_type<tc>, window_params = [{transform_indices = @transform_0, window_bounds = array<i64: 8, 128>}, {transform_indices = @transform_1, window_bounds = array<i64: 128, 128>}, {transform_indices = @transform_2, window_bounds = array<i64: 1, 128>}, {transform_indices = @transform_3, window_bounds = array<i64: 8, 128>}]} {
    %c0 = arith.constant 0 : index
    %c0_0 = arith.constant 0 : index
    %0 = vector.load %arg2[%c0, %c0_0] : memref<8x128xf32, #tpu.memory_space<vmem>>, vector<8x128xf32>
    %c0_1 = arith.constant 0 : index
    %c0_2 = arith.constant 0 : index
    %1 = vector.load %arg3[%c0_1, %c0_2] : memref<128x128xf32, #tpu.memory_space<vmem>>, vector<128x128xf32>
    %cst = arith.constant dense<0.000000e+00> : vector<8x128xf32>
    %2 = tpu.matmul %0, %1, %cst {dimension_numbers = #tpu.dot_dimension_numbers<[1], [0], [0], [1], [0, 0, 1, 1], [], []>} : vector<8x128xf32>, vector<128x128xf32>, vector<8x128xf32> -> vector<8x128xf32>
    %c0_3 = arith.constant 0 : index
    %c0_4 = arith.constant 0 : index
    %3 = vector.load %arg4[%c0_3, %c0_4] : memref<1x128xf32, #tpu.memory_space<vmem>>, vector<1x128xf32>
    %4 = vector.broadcast %3 : vector<1x128xf32> to vector<8x128xf32>
    %5 = arith.addf %2, %4 : vector<8x128xf32>
    %c0_5 = arith.constant 0 : index
    %c0_6 = arith.constant 0 : index
    %6 = vector.load %arg5[%c0_5, %c0_6] : memref<8x128xf32, #tpu.memory_space<vmem>>, vector<8x128xf32>
    tpu.vector_store %arg5[%c0_5, %c0_6], %5 {strides = array<i32>} : memref<8x128xf32, #tpu.memory_space<vmem>>, vector<8x128xf32>,
    return
  }
  func.func @transform_0(%arg0: i32, %arg1: i32) -> (i32, i32) {
    %c0_i32 = arith.constant 0 : i32
    %c0_i32_0 = arith.constant 0 : i32
    return %arg0, %c0_i32 : i32, i32
  }
  func.func @transform_1(%arg0: i32, %arg1: i32) -> (i32, i32) {
    %c0_i32 = arith.constant 0 : i32
    %c0_i32_0 = arith.constant 0 : i32
    return %c0_i32, %arg1 : i32, i32
  }
  func.func @transform_2(%arg0: i32, %arg1: i32) -> (i32, i32) {
    %c0_i32 = arith.constant 0 : i32
    %c0_i32_0 = arith.constant 0 : i32
    return %c0_i32, %arg1 : i32, i32
  }
  func.func @transform_3(%arg0: i32, %arg1: i32) -> (i32, i32) {
    %c0_i32 = arith.constant 0 : i32
    return %arg0, %arg1 : i32, i32
  }
}

</mosaic_0001>

<llo_original>
// kernel: tpu_custom_call.1
$region0: #{tpu_custom_call.1}
  #allocation0 [shape = 'u32[]', space=smem, size = 0x4, offset = 0x4, fixed_abs, tag = 'smem constant byte address 0x4 - core index']
  #allocation1 [shape = 'u32[144,128]{1,0:T(1,128)}', space=vmem, size = 0x12000, scoped, tag = 'internal scratch']
  %s0 = inlined_call_operand.hbm [shape: f32[8,128], index: 0, kind: input, shape index: {}]
  %s1 = inlined_call_operand.hbm [shape: f32[128,128], index: 1, kind: input, shape index: {}]
  %s2 = inlined_call_operand.vmem [shape: f32[1,128], index: 2, kind: input, shape index: {}]
  %s3 = inlined_call_operand.hbm [shape: f32[8,128], index: 3, kind: output, shape index: {}]
  %s4 = sld [smem:[#allocation0]]
  $region30: #{tpu_custom_call.1} parent=0
    _
  %s6 = ssub.s32 1, %s4
  %s7 = scalar_select 0, %s6, %s4
  $region1: #{tpu_custom_call.1} parent=0
    #allocation2 [shape = 'u8[4096]{0}', space=vmem, size = 0x1000, scoped, tag = 'input window, operand 0, single buffered']
    #allocation3 [shape = 's32[1]{0}', space=sflag, size = 0x4, scoped, tag = 'scoped memory for tpu_custom_call.1']
    #allocation4 [shape = 's32[1]{0}', space=sflag, size = 0x4, scoped, tag = 'scoped memory for tpu_custom_call.1']
    #allocation5 [shape = 'u8[65536]{0}', space=vmem, size = 0x10000, scoped, tag = 'input window, operand 1, single buffered']
    #allocation6 [shape = 's32[1]{0}', space=sflag, size = 0x4, scoped, tag = 'scoped memory for tpu_custom_call.1']
    #allocation7 [shape = 'u8[4096]{0}', space=vmem, size = 0x1000, scoped, tag = 'output window, operand 0, single buffered']
    %8 = vsyncpa [#allocation3], 0
    %9 = vsyncpa [#allocation6], 0
    %10 = vsyncpa [#allocation4], 0
    // Predicated region
    $region2: #{tpu_custom_call.1} parent=1 // pred_check
      _
    $region3: #{tpu_custom_call.1} parent=1 // pred_check_branch
      %12 = sbr.rel (0) target = $region5
    $region4: #{tpu_custom_call.1} parent=1 // pred_region
      %s14 = ssub.s32 128, 128
      %15 = vsyncadd [#allocation3], %s14
      %s17 = sshll.u32 [#allocation2], 4
      %s18 = int_to_ptr.vmem [resolvable:$true] %s17
      %20 = dma.hbm_to_vmem [thread:$0]  %s0, 128, %s18, [#allocation3]
    $region5: #{tpu_custom_call.1} parent=1 // pred_fallthru
      _
    // Predicated region
    $region6: #{tpu_custom_call.1} parent=1 // pred_check
      _
    $region7: #{tpu_custom_call.1} parent=1 // pred_check_branch
      %22 = sbr.rel (0) target = $region9
    $region8: #{tpu_custom_call.1} parent=1 // pred_region
      %s24 = ssub.s32 2048, 2048
      %25 = vsyncadd [#allocation6], %s24
      %s26 = sshll.u32 [#allocation5], 4
      %s27 = int_to_ptr.vmem [resolvable:$true] %s26
      %32 = dma.hbm_to_vmem [thread:$0]  %s1, 2048, %s27, [#allocation6], 128, 128, 8
    $region9: #{tpu_custom_call.1} parent=1 // pred_fallthru
      _
    // Predicated region
    $region10: #{tpu_custom_call.1} parent=1 // pred_check
      _
    $region11: #{tpu_custom_call.1} parent=1 // pred_check_branch
      %34 = sbr.rel (0) target = $region13
    $region12: #{tpu_custom_call.1} parent=1 // pred_region
      _
    $region13: #{tpu_custom_call.1} parent=1 // pred_fallthru
      _
    // Predicated region
    $region14: #{tpu_custom_call.1} parent=1 // pred_check
      _
    $region15: #{tpu_custom_call.1} parent=1 // pred_check_branch
      %36 = sbr.rel (0) target = $region17
    $region16: #{tpu_custom_call.1} parent=1 // pred_region
      %37 = dma.done [#allocation3], 128
    $region17: #{tpu_custom_call.1} parent=1 // pred_fallthru
      _
    // Predicated region
    $region18: #{tpu_custom_call.1} parent=1 // pred_check
      _
    $region19: #{tpu_custom_call.1} parent=1 // pred_check_branch
      %39 = sbr.rel (0) target = $region21
    $region20: #{tpu_custom_call.1} parent=1 // pred_region
      %40 = dma.done [#allocation6], 2048
    $region21: #{tpu_custom_call.1} parent=1 // pred_fallthru
      _
    %v41 = vld [vmem:[#allocation2] sm:$0xff]
    %v42 = vld [vmem:[#allocation5] sm:$0xff]
    %v43 = vld [vmem:[#allocation5 + $0x8] sm:$0xff]
    %v44 = vld [vmem:[#allocation5 + $0x10] sm:$0xff]
    %v45 = vld [vmem:[#allocation5 + $0x18] sm:$0xff]
    %v46 = vld [vmem:[#allocation5 + $0x20] sm:$0xff]
    %v47 = vld [vmem:[#allocation5 + $0x28] sm:$0xff]
    %v48 = vld [vmem:[#allocation5 + $0x30] sm:$0xff]
    %v49 = vld [vmem:[#allocation5 + $0x38] sm:$0xff]
    %v50 = vld [vmem:[#allocation5 + $0x40] sm:$0xff]
    %v51 = vld [vmem:[#allocation5 + $0x48] sm:$0xff]
    %v52 = vld [vmem:[#allocation5 + $0x50] sm:$0xff]
    %v53 = vld [vmem:[#allocation5 + $0x58] sm:$0xff]
    %v54 = vld [vmem:[#allocation5 + $0x60] sm:$0xff]
    %v55 = vld [vmem:[#allocation5 + $0x68] sm:$0xff]
    %v56 = vld [vmem:[#allocation5 + $0x70] sm:$0xff]
    %v57 = vld [vmem:[#allocation5 + $0x78] sm:$0xff]
    %v58 = vld [vmem:[%s2] sm:$0x1]
    %v60 = vlaneseq
    %v61 = vshrl.u32 %v60, 7
    %v62 = vsub.s32 0, %v61
    %v63 = vrot.slane %v58, %v62
    %65 = vmatprep.subr.mxu0 0.0
    %66 = vmatpush1.msra.mxu0 %v42
    %67 = vmatprep.subr.mxu0 0.0
    %68 = vmatpush1.msra.mxu0 %v43
    %69 = vmatprep.subr.mxu0 0.0
    %70 = vmatpush1.msra.mxu0 %v44
    %71 = vmatprep.subr.mxu0 0.0
    %72 = vmatpush1.msra.mxu0 %v45
    %73 = vmatprep.subr.mxu0 0.0
    %74 = vmatpush1.msra.mxu0 %v46
    %75 = vmatprep.subr.mxu0 0.0
    %76 = vmatpush1.msra.mxu0 %v47
    %77 = vmatprep.subr.mxu0 0.0
    %78 = vmatpush1.msra.mxu0 %v48
    %79 = vmatprep.subr.mxu0 0.0
    %80 = vmatpush1.msra.mxu0 %v49
    %81 = vmatprep.subr.mxu0 0.0
    %82 = vmatpush1.msra.mxu0 %v50
    %83 = vmatprep.subr.mxu0 0.0
    %84 = vmatpush1.msra.mxu0 %v51
    %85 = vmatprep.subr.mxu0 0.0
    %86 = vmatpush1.msra.mxu0 %v52
    %87 = vmatprep.subr.mxu0 0.0
    %88 = vmatpush1.msra.mxu0 %v53
    %89 = vmatprep.subr.mxu0 0.0
    %90 = vmatpush1.msra.mxu0 %v54
    %91 = vmatprep.subr.mxu0 0.0
    %92 = vmatpush1.msra.mxu0 %v55
    %93 = vmatprep.subr.mxu0 0.0
    %94 = vmatpush1.msra.mxu0 %v56
    %95 = vmatprep.subr.mxu0 0.0
    %96 = vmatpush1.msra.mxu0 %v57
    %97 = vmatprep.subr.mxu0 0.0
    %98 = vmatpush1.msra.mxu0 0.0
    %99 = vmatprep.subr.mxu0 0.0
    %100 = vmatpush1.msra.mxu0 0.0
    %101 = vmatprep.subr.mxu0 0.0
    %102 = vmatpush1.msra.mxu0 0.0
    %103 = vmatprep.subr.mxu0 0.0
    %104 = vmatpush1.msra.mxu0 0.0
    %105 = vmatprep.subr.mxu0 0.0
    %106 = vmatpush1.msra.mxu0 0.0
    %107 = vmatprep.subr.mxu0 0.0
    %108 = vmatpush1.msra.mxu0 0.0
    %109 = vmatprep.subr.mxu0 0.0
    %110 = vmatpush1.msra.mxu0 0.0
    %111 = vmatprep.subr.mxu0 0.0
    %112 = vmatpush1.msra.mxu0 0.0
    %113 = vmatprep.subr.mxu0 0.0
    %114 = vmatpush1.msra.mxu0 0.0
    %115 = vmatprep.subr.mxu0 0.0
    %116 = vmatpush1.msra.mxu0 0.0
    %117 = vmatprep.subr.mxu0 0.0
    %118 = vmatpush1.msra.mxu0 0.0
    %119 = vmatprep.subr.mxu0 0.0
    %120 = vmatpush1.msra.mxu0 0.0
    %121 = vmatprep.subr.mxu0 0.0
    %122 = vmatpush1.msra.mxu0 0.0
    %123 = vmatprep.subr.mxu0 0.0
    %124 = vmatpush1.msra.mxu0 0.0
    %125 = vmatprep.subr.mxu0 0.0
    %126 = vmatpush1.msra.mxu0 0.0
    %127 = vmatprep.subr.mxu0 0.0
    %128 = vmatpush1.msra.mxu0 0.0
    %129 = vmatprep.mubr.f32.mxu0 0.0
    %130 = vmatmul.mubr.f32.gmra.mrb[0].mxu0 %v41
    %v131 = vpop.f32.mrb[0].mxu0
    %v132 = vadd.f32 %v63, %v131
    %v133 = vpop.f32.mrb[0].mxu0
    %134 = vdwg.mxu0
    %135 = vst [vmem:[#allocation7] sm:$0xff] %v132
    // Predicated region
    $region22: #{tpu_custom_call.1} parent=1 // pred_check
      _
    $region23: #{tpu_custom_call.1} parent=1 // pred_check_branch
      %137 = sbr.rel (0) target = $region25
    $region24: #{tpu_custom_call.1} parent=1 // pred_region
      %s139 = ssub.s32 128, 128
      %140 = vsyncadd [#allocation4], %s139
      %s142 = sshll.u32 [#allocation7], 4
      %s143 = int_to_ptr.vmem [resolvable:$true] %s142
      %145 = dma.vmem_to_hbm [thread:$0]  %s143, 128, %s3, [#allocation4]
    $region25: #{tpu_custom_call.1} parent=1 // pred_fallthru
      _
    // Predicated region
    $region26: #{tpu_custom_call.1} parent=1 // pred_check
      _
    $region27: #{tpu_custom_call.1} parent=1 // pred_check_branch
      %147 = sbr.rel (0) target = $region29
    $region28: #{tpu_custom_call.1} parent=1 // pred_region
      %148 = dma.done [#allocation4], 128
    $region29: #{tpu_custom_call.1} parent=1 // pred_fallthru
      _
    %149 = vsyncpa [#allocation3], 1
    %150 = vsyncpa [#allocation6], 1
    %151 = vsyncpa [#allocation4], 1

</llo_original>
